<compile_context>
chip_gen: v7x
topology: tpu7x:2x2x1
jax: 0.10.0
libtpu: 0.0.40
codegen_flags: <defaults>
</compile_context>

<pallas_src>
import functools

import jax
import jax.numpy as jnp
from jax.experimental import pallas as pl
from jax.experimental.pallas import tpu as pltpu


# ----------------------------------------------------------------------------
# Kernel
# ----------------------------------------------------------------------------
def _ensemble_mlp_kernel(x_ref, w_in_ref, b_in_ref, w_core_ref, b_core_ref,
                         w_out_ref, b_out_ref, out_ref, phi_ref,
                         *, n_core, compute_dtype):
    # x_ref:      (tile_N, d_in)             shared across ensemble members
    # w_in_ref:   (d_in, CHp)                member c -> column block c
    # b_in_ref:   (1, CHp)                   f32
    # w_core_ref: (max(n_core,1), CHp, CHp)  block-diagonal per layer
    # b_core_ref: (max(n_core,1), 1, CHp)    f32
    # w_out_ref:  (CHp, COp)                 block-diagonal, zero-padded lanes
    # b_out_ref:  (1, COp)                   f32
    # out_ref:    (tile_N, COp)
    # phi_ref:    (tile_N, CHp)
    x = x_ref[...].astype(compute_dtype)

    # Input layer: one wide MXU matmul covers all ensemble members.
    h = jnp.dot(x, w_in_ref[...], preferred_element_type=jnp.float32)
    h = h + b_in_ref[...]
    h = jnp.maximum(h, 0.01 * h)                       # leaky_relu, 2 VPU ops

    # Core layers: block-diagonal lane-dense MXU matmuls (static unroll).
    for i in range(n_core):
        h = jnp.dot(h.astype(compute_dtype), w_core_ref[i],
                    preferred_element_type=jnp.float32)
        h = h + b_core_ref[i]
        h = jnp.maximum(h, 0.01 * h)

    phi_ref[...] = h.astype(phi_ref.dtype)

    # Output layer (no activation).
    out = jnp.dot(h.astype(compute_dtype), w_out_ref[...],
                  preferred_element_type=jnp.float32)
    out_ref[...] = (out + b_out_ref[...]).astype(out_ref.dtype)


# ----------------------------------------------------------------------------
# Parameter packing (run ONCE at init, not per forward call)
# ----------------------------------------------------------------------------
def _round_up(x, m):
    return ((x + m - 1) // m) * m


def _block_diag(w):
    """(C, di, do) -> (C*di, C*do) with w[c] on the c-th diagonal block."""
    C, di, do = w.shape
    out = jnp.zeros((C, di, C, do), w.dtype)
    out = out.at[jnp.arange(C), :, jnp.arange(C), :].set(w)
    return out.reshape(C * di, C * do)


def pack_params(params, compute_dtype=jnp.float32, out_dtype=None):
    """Pack (C, i, o) ensemble params into lane-dense block-diagonal layout.

    Returns (packed_arrays, meta).  Call once outside the jitted forward.
    """
    w_in, b_in = params["w_in"], params["b_in"]
    w_core, b_core = params["w_core"], params["b_core"]
    w_out, b_out = params["w_out"], params["b_out"]

    C, d_in, d_hidden = w_in.shape
    n_core = w_core.shape[0]
    d_out = w_out.shape[-1]
    CH, CO = C * d_hidden, C * d_out
    CH_pad = max(_round_up(CH, 128), 128)        # lane-dense hidden width
    CO_pad = max(_round_up(CO, 128), 128)        # lane-dense output width

    def pad2(a, rows, cols):
        return jnp.pad(a, ((0, rows - a.shape[0]), (0, cols - a.shape[1])))

    w_in_p = pad2(jnp.transpose(w_in, (1, 0, 2)).reshape(d_in, CH), d_in, CH_pad)
    b_in_p = pad2(b_in.reshape(1, CH), 1, CH_pad)
    if n_core > 0:
        w_core_p = jnp.stack(
            [pad2(_block_diag(w_core[i]), CH_pad, CH_pad) for i in range(n_core)])
        b_core_p = jnp.stack(
            [pad2(b_core[i].reshape(1, CH), 1, CH_pad) for i in range(n_core)])
    else:
        w_core_p = jnp.zeros((1, CH_pad, CH_pad), w_in.dtype)
        b_core_p = jnp.zeros((1, 1, CH_pad), w_in.dtype)
    w_out_p = pad2(_block_diag(w_out), CH_pad, CO_pad)
    b_out_p = pad2(b_out.reshape(1, CO), 1, CO_pad)

    packed = {
        "w_in": w_in_p.astype(compute_dtype),
        "b_in": b_in_p.astype(jnp.float32),
        "w_core": w_core_p.astype(compute_dtype),
        "b_core": b_core_p.astype(jnp.float32),
        "w_out": w_out_p.astype(compute_dtype),
        "b_out": b_out_p.astype(jnp.float32),
    }
    meta = dict(C=C, d_in=d_in, d_hidden=d_hidden, n_core=n_core, d_out=d_out,
                CH=CH, CO=CO, CH_pad=CH_pad, CO_pad=CO_pad,
                compute_dtype=compute_dtype, out_dtype=out_dtype)
    return packed, meta


# ----------------------------------------------------------------------------
# Tiling / VMEM budget
# ----------------------------------------------------------------------------
def _derive_tiling(N, d_in, CH_pad, CO_pad, weight_bytes, in_item, out_item):
    try:
        info = pltpu.get_tpu_info()
        vmem_cap = int(getattr(info, "vmem_capacity_bytes", 64 << 20))
    except Exception:
        vmem_cap = 64 << 20                      # v7x per-TensorCore fallback
    budget = int(vmem_cap * 0.85)                # never plan for 100% of VMEM

    # Per-row cost: double-buffered streaming IO + in-kernel f32 live activations.
    io_row = d_in * in_item + (CH_pad + CO_pad) * out_item
    tmp_row = (2 * CH_pad + CO_pad) * 4
    per_row = 2 * io_row + tmp_row
    headroom = 2 << 20                           # Mosaic internal scratch
    avail = max(budget - weight_bytes - headroom, 1 << 20)
    cap_rows = max(8, min(2048, ((avail // per_row) // 8) * 8))

    N8 = _round_up(N, 8)
    tile_n = min(cap_rows, N8)
    # Aim for >=4 grid steps (>=2 per v7x TensorCore) once tiles would stay
    # >=256 rows, so input DMA / output writeback overlap compute on both cores.
    if N8 >= 4 * 256 and pl.cdiv(N8, tile_n) < 4:
        tile_n = max(256, _round_up(pl.cdiv(N8, 4), 8))
    num_tiles = pl.cdiv(N8, tile_n)
    tile_n = _round_up(pl.cdiv(N8, num_tiles), 8)   # divide N8 as evenly as possible
    N_pad = num_tiles * tile_n

    vmem_need = weight_bytes + tile_n * per_row + headroom
    vmem_limit = int(min(budget, max(16 << 20, vmem_need)))
    return tile_n, num_tiles, N_pad, vmem_limit


# ----------------------------------------------------------------------------
# Forward
# ----------------------------------------------------------------------------
def einmix_ensemble_forward(inp, packed, *, meta):
    """inp: (b, l, d_in).  Returns (outputs, phis) matching the PyTorch module."""
    C, d_in, d_hidden = meta["C"], meta["d_in"], meta["d_hidden"]
    n_core, d_out = meta["n_core"], meta["d_out"]
    CH, CO = meta["CH"], meta["CO"]
    CH_pad, CO_pad = meta["CH_pad"], meta["CO_pad"]
    compute_dtype = meta["compute_dtype"]
    out_dtype = meta["out_dtype"] or inp.dtype

    b, l, _ = inp.shape
    N = b * l

    weight_bytes = sum(int(v.size) * v.dtype.itemsize for v in packed.values())
    tile_n, num_tiles, N_pad, vmem_limit = _derive_tiling(
        N, d_in, CH_pad, CO_pad, weight_bytes,
        in_item=inp.dtype.itemsize, out_item=jnp.dtype(out_dtype).itemsize)

    x2d = inp.reshape(N, d_in)
    if N_pad != N:
        # TODO(synk): handle the ragged last tile with a masked store instead
        # of this whole-array pad copy (only hit when tile_n does not divide N).
        x2d = jnp.pad(x2d, ((0, N_pad - N), (0, 0)))

    kernel = functools.partial(_ensemble_mlp_kernel,
                               n_core=n_core, compute_dtype=compute_dtype)

    def vmem_resident():
        # Whole-array resident in VMEM, single-buffered (no pipeline 2x cost).
        return pl.BlockSpec(memory_space=pltpu.MemorySpace.VMEM)

    out_flat, phi_flat = pl.pallas_call(
        kernel,
        out_shape=(
            jax.ShapeDtypeStruct((N_pad, CO_pad), out_dtype),
            jax.ShapeDtypeStruct((N_pad, CH_pad), out_dtype),
        ),
        grid_spec=pltpu.PrefetchScalarGridSpec(
            num_scalar_prefetch=0,
            grid=(num_tiles,),
            in_specs=[
                pl.BlockSpec((tile_n, d_in), lambda n: (n, 0)),
                vmem_resident(),   # w_in
                vmem_resident(),   # b_in
                vmem_resident(),   # w_core
                vmem_resident(),   # b_core
                vmem_resident(),   # w_out
                vmem_resident(),   # b_out
            ],
            out_specs=[
                pl.BlockSpec((tile_n, CO_pad), lambda n: (n, 0)),
                pl.BlockSpec((tile_n, CH_pad), lambda n: (n, 0)),
            ],
        ),
        compiler_params=pltpu.CompilerParams(
            dimension_semantics=("parallel",),
            vmem_limit_bytes=vmem_limit,
        ),
    )(x2d, packed["w_in"], packed["b_in"], packed["w_core"], packed["b_core"],
      packed["w_out"], packed["b_out"])

    # (N, C*d) row-major == (b, l, C, d) row-major; slices drop pad rows/lanes
    # (no-ops when nothing was padded).
    outputs = out_flat[:N, :CO].reshape(b, l, C, d_out)
    phis = phi_flat[:N, :CH].reshape(b, l, C, d_hidden)
    return outputs, phis


# ----------------------------------------------------------------------------
# Params / reference
# ----------------------------------------------------------------------------
def make_params(key, ensemble_size, inp_dim, d_hidden, n_layers, out_dim):
    """Deterministic parameter init (uniform, fan-in scaled like einops Mix)."""
    n_core = n_layers - 1
    ks = jax.random.split(key, 6)

    def unif(k, shape, fan_in):
        bound = 1.0 / (fan_in ** 0.5)
        return jax.random.uniform(k, shape, jnp.float32, -bound, bound)

    return {
        "w_in": unif(ks[0], (ensemble_size, inp_dim, d_hidden), inp_dim),
        "b_in": unif(ks[1], (ensemble_size, d_hidden), inp_dim),
        "w_core": unif(ks[2], (n_core, ensemble_size, d_hidden, d_hidden), d_hidden),
        "b_core": unif(ks[3], (n_core, ensemble_size, d_hidden), d_hidden),
        "w_out": unif(ks[4], (ensemble_size, d_hidden, out_dim), d_hidden),
        "b_out": unif(ks[5], (ensemble_size, out_dim), d_hidden),
    }


def _leaky_relu(x, negative_slope=0.01):
    return jnp.where(x > 0, x, negative_slope * x)


def reference_forward(inp, params):
    """Pure-JAX reference mirroring the PyTorch module (dropout_p=0)."""
    h = jnp.einsum("bli,cio->blco", inp, params["w_in"]) + params["b_in"]
    h = _leaky_relu(h)
    for i in range(params["w_core"].shape[0]):
        h = jnp.einsum("blci,cio->blco", h, params["w_core"][i]) + params["b_core"][i]
        h = _leaky_relu(h)
    out = jnp.einsum("blci,cio->blco", h, params["w_out"]) + params["b_out"]
    return out, h


if __name__ == "__main__":
    # Small shapes consistent with the module's forward.
    B, L = 2, 8
    ENSEMBLE, D_IN, D_HIDDEN, N_LAYERS, D_OUT = 4, 32, 32, 3, 8

    key = jax.random.PRNGKey(0)
    k_x, k_p = jax.random.split(key)
    inp = jax.random.normal(k_x, (B, L, D_IN), dtype=jnp.float32)
    params = make_params(k_p, ENSEMBLE, D_IN, D_HIDDEN, N_LAYERS, D_OUT)

    ref_out, ref_phi = reference_forward(inp, params)

    # --- f32 matmul path: bitwise-level match with the PyTorch module ---
    packed32, meta32 = pack_params(params, compute_dtype=jnp.float32)
    fwd32 = jax.jit(lambda x, p: einmix_ensemble_forward(x, p, meta=meta32))
    out32, phi32 = fwd32(inp, packed32)
    jax.block_until_ready((out32, phi32))
    assert out32.shape == (B, L, ENSEMBLE, D_OUT)
    assert phi32.shape == (B, L, ENSEMBLE, D_HIDDEN)
    assert jnp.allclose(out32, ref_out, atol=1e-4, rtol=1e-4)
    assert jnp.allclose(phi32, ref_phi, atol=1e-4, rtol=1e-4)

    # --- bf16 matmul / f32 accumulate path (higher MXU issue rate) ---
    packed16, meta16 = pack_params(params, compute_dtype=jnp.bfloat16)
    fwd16 = jax.jit(lambda x, p: einmix_ensemble_forward(x, p, meta=meta16))
    out16, phi16 = fwd16(inp, packed16)
    jax.block_until_ready((out16, phi16))
    assert jnp.allclose(out16, ref_out, atol=5e-2, rtol=5e-2)
    assert jnp.allclose(phi16, ref_phi, atol=5e-2, rtol=5e-2)

    print("KERNEL_OK")
</pallas_src>

<mosaic_0001>
module attributes {stable_mosaic.version = 11 : i64} {
  func.func @_ensemble_mlp_kernel(%arg0: i32, %arg1: memref<16x32xf32, #tpu.memory_space<vmem>>, %arg2: memref<32x128xf32, #tpu.memory_space<vmem>>, %arg3: memref<1x128xf32, #tpu.memory_space<vmem>>, %arg4: memref<2x128x128xf32, #tpu.memory_space<vmem>>, %arg5: memref<2x1x128xf32, #tpu.memory_space<vmem>>, %arg6: memref<128x128xf32, #tpu.memory_space<vmem>>, %arg7: memref<1x128xf32, #tpu.memory_space<vmem>>, %arg8: memref<16x128xf32, #tpu.memory_space<vmem>>, %arg9: memref<16x128xf32, #tpu.memory_space<vmem>>) attributes {dimension_semantics = [#tpu.dimension_semantics<parallel>], iteration_bounds = array<i64: 1>, scalar_prefetch = 0 : i64, scratch_operands = 0 : i64, tpu.core_type = #tpu.core_type<tc>, window_params = [{transform_indices = @transform_0, window_bounds = array<i64: 16, 32>}, {pipeline_mode = #tpu.pipeline_mode<synchronous>, transform_indices = @transform_1, window_bounds = array<i64: 32, 128>}, {pipeline_mode = #tpu.pipeline_mode<synchronous>, transform_indices = @transform_2, window_bounds = array<i64: 1, 128>}, {pipeline_mode = #tpu.pipeline_mode<synchronous>, transform_indices = @transform_3, window_bounds = array<i64: 2, 128, 128>}, {pipeline_mode = #tpu.pipeline_mode<synchronous>, transform_indices = @transform_4, window_bounds = array<i64: 2, 1, 128>}, {pipeline_mode = #tpu.pipeline_mode<synchronous>, transform_indices = @transform_5, window_bounds = array<i64: 128, 128>}, {pipeline_mode = #tpu.pipeline_mode<synchronous>, transform_indices = @transform_6, window_bounds = array<i64: 1, 128>}, {transform_indices = @transform_7, window_bounds = array<i64: 16, 128>}, {transform_indices = @transform_8, window_bounds = array<i64: 16, 128>}]} {
    %c0 = arith.constant 0 : index
    %c0_0 = arith.constant 0 : index
    %0 = vector.load %arg1[%c0, %c0_0] : memref<16x32xf32, #tpu.memory_space<vmem>>, vector<16x32xf32>
    %c0_1 = arith.constant 0 : index
    %c0_2 = arith.constant 0 : index
    %1 = vector.load %arg2[%c0_1, %c0_2] : memref<32x128xf32, #tpu.memory_space<vmem>>, vector<32x128xf32>
    %cst = arith.constant dense<0.000000e+00> : vector<16x128xf32>
    %2 = tpu.matmul %0, %1, %cst {dimension_numbers = #tpu.dot_dimension_numbers<[1], [0], [0], [1], [0, 0, 1, 1], [], []>} : vector<16x32xf32>, vector<32x128xf32>, vector<16x128xf32> -> vector<16x128xf32>
    %c0_3 = arith.constant 0 : index
    %c0_4 = arith.constant 0 : index
    %3 = vector.load %arg3[%c0_3, %c0_4] : memref<1x128xf32, #tpu.memory_space<vmem>>, vector<1x128xf32>
    %4 = vector.broadcast %3 : vector<1x128xf32> to vector<16x128xf32>
    %5 = arith.addf %2, %4 : vector<16x128xf32>
    %cst_5 = arith.constant 0.00999999977 : f32
    %6 = vector.broadcast %cst_5 : f32 to vector<16x128xf32>
    %7 = arith.mulf %6, %5 : vector<16x128xf32>
    %8 = arith.maximumf %5, %7 : vector<16x128xf32>
    %c0_6 = arith.constant 0 : index
    %c0_7 = arith.constant 0 : index
    %c0_8 = arith.constant 0 : index
    %9 = vector.load %arg4[%c0_6, %c0_7, %c0_8] : memref<2x128x128xf32, #tpu.memory_space<vmem>>, vector<1x128x128xf32>
    %10 = vector.shape_cast %9 : vector<1x128x128xf32> to vector<128x128xf32>
    %cst_9 = arith.constant dense<0.000000e+00> : vector<16x128xf32>
    %11 = tpu.matmul %8, %10, %cst_9 {dimension_numbers = #tpu.dot_dimension_numbers<[1], [0], [0], [1], [0, 0, 1, 1], [], []>} : vector<16x128xf32>, vector<128x128xf32>, vector<16x128xf32> -> vector<16x128xf32>
    %c0_10 = arith.constant 0 : index
    %c0_11 = arith.constant 0 : index
    %c0_12 = arith.constant 0 : index
    %12 = vector.load %arg5[%c0_10, %c0_11, %c0_12] : memref<2x1x128xf32, #tpu.memory_space<vmem>>, vector<1x1x128xf32>
    %13 = vector.shape_cast %12 : vector<1x1x128xf32> to vector<1x128xf32>
    %14 = vector.broadcast %13 : vector<1x128xf32> to vector<16x128xf32>
    %15 = arith.addf %11, %14 : vector<16x128xf32>
    %cst_13 = arith.constant 0.00999999977 : f32
    %16 = vector.broadcast %cst_13 : f32 to vector<16x128xf32>
    %17 = arith.mulf %16, %15 : vector<16x128xf32>
    %18 = arith.maximumf %15, %17 : vector<16x128xf32>
    %c1 = arith.constant 1 : index
    %c0_14 = arith.constant 0 : index
    %c0_15 = arith.constant 0 : index
    %19 = vector.load %arg4[%c1, %c0_14, %c0_15] : memref<2x128x128xf32, #tpu.memory_space<vmem>>, vector<1x128x128xf32>
    %20 = vector.shape_cast %19 : vector<1x128x128xf32> to vector<128x128xf32>
    %cst_16 = arith.constant dense<0.000000e+00> : vector<16x128xf32>
    %21 = tpu.matmul %18, %20, %cst_16 {dimension_numbers = #tpu.dot_dimension_numbers<[1], [0], [0], [1], [0, 0, 1, 1], [], []>} : vector<16x128xf32>, vector<128x128xf32>, vector<16x128xf32> -> vector<16x128xf32>
    %c1_17 = arith.constant 1 : index
    %c0_18 = arith.constant 0 : index
    %c0_19 = arith.constant 0 : index
    %22 = vector.load %arg5[%c1_17, %c0_18, %c0_19] : memref<2x1x128xf32, #tpu.memory_space<vmem>>, vector<1x1x128xf32>
    %23 = vector.shape_cast %22 : vector<1x1x128xf32> to vector<1x128xf32>
    %24 = vector.broadcast %23 : vector<1x128xf32> to vector<16x128xf32>
    %25 = arith.addf %21, %24 : vector<16x128xf32>
    %cst_20 = arith.constant 0.00999999977 : f32
    %26 = vector.broadcast %cst_20 : f32 to vector<16x128xf32>
    %27 = arith.mulf %26, %25 : vector<16x128xf32>
    %28 = arith.maximumf %25, %27 : vector<16x128xf32>
    %c0_21 = arith.constant 0 : index
    %c0_22 = arith.constant 0 : index
    %29 = vector.load %arg9[%c0_21, %c0_22] : memref<16x128xf32, #tpu.memory_space<vmem>>, vector<16x128xf32>
    tpu.vector_store %arg9[%c0_21, %c0_22], %28 {strides = array<i32>} : memref<16x128xf32, #tpu.memory_space<vmem>>, vector<16x128xf32>,
    %c0_23 = arith.constant 0 : index
    %c0_24 = arith.constant 0 : index
    %30 = vector.load %arg6[%c0_23, %c0_24] : memref<128x128xf32, #tpu.memory_space<vmem>>, vector<128x128xf32>
    %cst_25 = arith.constant dense<0.000000e+00> : vector<16x128xf32>
    %31 = tpu.matmul %28, %30, %cst_25 {dimension_numbers = #tpu.dot_dimension_numbers<[1], [0], [0], [1], [0, 0, 1, 1], [], []>} : vector<16x128xf32>, vector<128x128xf32>, vector<16x128xf32> -> vector<16x128xf32>
    %c0_26 = arith.constant 0 : index
    %c0_27 = arith.constant 0 : index
    %32 = vector.load %arg7[%c0_26, %c0_27] : memref<1x128xf32, #tpu.memory_space<vmem>>, vector<1x128xf32>
    %33 = vector.broadcast %32 : vector<1x128xf32> to vector<16x128xf32>
    %34 = arith.addf %31, %33 : vector<16x128xf32>
    %c0_28 = arith.constant 0 : index
    %c0_29 = arith.constant 0 : index
    %35 = vector.load %arg8[%c0_28, %c0_29] : memref<16x128xf32, #tpu.memory_space<vmem>>, vector<16x128xf32>
    tpu.vector_store %arg8[%c0_28, %c0_29], %34 {strides = array<i32>} : memref<16x128xf32, #tpu.memory_space<vmem>>, vector<16x128xf32>,
    return
  }
  func.func @transform_0(%arg0: i32) -> (i32, i32) {
    %c0_i32 = arith.constant 0 : i32
    %c0_i32_0 = arith.constant 0 : i32
    return %arg0, %c0_i32 : i32, i32
  }
  func.func @transform_1(%arg0: i32) -> (i32, i32) {
    %c0_i32 = arith.constant 0 : i32
    %c0_i32_0 = arith.constant 0 : i32
    %c0_i32_1 = arith.constant 0 : i32
    return %c0_i32, %c0_i32_0 : i32, i32
  }
  func.func @transform_2(%arg0: i32) -> (i32, i32) {
    %c0_i32 = arith.constant 0 : i32
    %c0_i32_0 = arith.constant 0 : i32
    %c0_i32_1 = arith.constant 0 : i32
    return %c0_i32, %c0_i32_0 : i32, i32
  }
  func.func @transform_3(%arg0: i32) -> (i32, i32, i32) {
    %c0_i32 = arith.constant 0 : i32
    %c0_i32_0 = arith.constant 0 : i32
    %c0_i32_1 = arith.constant 0 : i32
    %c0_i32_2 = arith.constant 0 : i32
    return %c0_i32, %c0_i32_0, %c0_i32_1 : i32, i32, i32
  }
  func.func @transform_4(%arg0: i32) -> (i32, i32, i32) {
    %c0_i32 = arith.constant 0 : i32
    %c0_i32_0 = arith.constant 0 : i32
    %c0_i32_1 = arith.constant 0 : i32
    %c0_i32_2 = arith.constant 0 : i32
    return %c0_i32, %c0_i32_0, %c0_i32_1 : i32, i32, i32
  }
  func.func @transform_5(%arg0: i32) -> (i32, i32) {
    %c0_i32 = arith.constant 0 : i32
    %c0_i32_0 = arith.constant 0 : i32
    %c0_i32_1 = arith.constant 0 : i32
    return %c0_i32, %c0_i32_0 : i32, i32
  }
  func.func @transform_6(%arg0: i32) -> (i32, i32) {
    %c0_i32 = arith.constant 0 : i32
    %c0_i32_0 = arith.constant 0 : i32
    %c0_i32_1 = arith.constant 0 : i32
    return %c0_i32, %c0_i32_0 : i32, i32
  }
  func.func @transform_7(%arg0: i32) -> (i32, i32) {
    %c0_i32 = arith.constant 0 : i32
    %c0_i32_0 = arith.constant 0 : i32
    return %arg0, %c0_i32 : i32, i32
  }
  func.func @transform_8(%arg0: i32) -> (i32, i32) {
    %c0_i32 = arith.constant 0 : i32
    %c0_i32_0 = arith.constant 0 : i32
    return %arg0, %c0_i32 : i32, i32
  }
}

</mosaic_0001>

<llo_original>
// kernel: _lambda_.1
$region0: #{_lambda_.1}
  #allocation0 [shape = 'u32[]', space=smem, size = 0x4, offset = 0x4, fixed_abs, tag = 'smem constant byte address 0x4 - core index']
  #allocation1 [shape = 'u32[144,128]{1,0:T(1,128)}', space=vmem, size = 0x12000, scoped, tag = 'internal scratch']
  %s0 = inlined_call_operand.hbm [shape: f32[16,32], index: 0, kind: input, shape index: {}]
  %s1 = inlined_call_operand.hbm [shape: f32[32,128], index: 1, kind: input, shape index: {}]
  %s2 = inlined_call_operand.vmem [shape: f32[1,128], index: 2, kind: input, shape index: {}]
  %s3 = inlined_call_operand.hbm [shape: f32[2,128,128], index: 3, kind: input, shape index: {}]
  %s4 = inlined_call_operand.vmem [shape: f32[2,1,128], index: 4, kind: input, shape index: {}]
  %s5 = inlined_call_operand.hbm [shape: f32[128,128], index: 5, kind: input, shape index: {}]
  %s6 = inlined_call_operand.vmem [shape: f32[1,128], index: 6, kind: input, shape index: {}]
  %s7 = inlined_call_operand.vmem [shape: f32[16,128], index: 7, kind: output, shape index: {0}]
  %s8 = inlined_call_operand.vmem [shape: f32[16,128], index: 8, kind: output, shape index: {1}]
  %9 = xla_tuple %s7, %s8
  %s10 = sld [smem:[#allocation0]]
  $region62: #{_lambda_.1} parent=0
    _
  %s12 = ssub.s32 1, %s10
  %s13 = scalar_select 0, %s12, %s10
  $region1: #{_lambda_.1} parent=0
    #allocation2 [shape = 'u8[8192]{0}', space=vmem, size = 0x2000, scoped, tag = 'input window, operand 0, single buffered']
    #allocation3 [shape = 's32[1]{0}', space=sflag, size = 0x4, scoped, tag = 'scoped memory for _lambda_.1']
    #allocation4 [shape = 'u8[16384]{0}', space=vmem, size = 0x4000, scoped, tag = 'input window, operand 1, single buffered']
    #allocation5 [shape = 's32[1]{0}', space=sflag, size = 0x4, scoped, tag = 'scoped memory for _lambda_.1']
    #allocation6 [shape = 'u8[131072]{0}', space=vmem, size = 0x20000, scoped, tag = 'input window, operand 3, single buffered']
    #allocation7 [shape = 'u8[65536]{0}', space=vmem, size = 0x10000, scoped, tag = 'input window, operand 5, single buffered']
    #allocation8 [shape = 's32[1]{0}', space=sflag, size = 0x4, scoped, tag = 'scoped memory for _lambda_.1']
    %14 = vsyncpa [#allocation3], 0
    %15 = vsyncpa [#allocation5], 0
    %16 = vsyncpa [#allocation8], 0
    // Predicated region
    $region2: #{_lambda_.1} parent=1 // pred_check
      _
    $region3: #{_lambda_.1} parent=1 // pred_check_branch
      %18 = sbr.rel (0) target = $region5
    $region4: #{_lambda_.1} parent=1 // pred_region
      %s20 = ssub.s32 256, 256
      %21 = vsyncadd [#allocation3], %s20
      %s22 = sshll.u32 [#allocation2], 4
      %s23 = int_to_ptr.vmem [resolvable:$true] %s22
      %28 = dma.hbm_to_vmem [thread:$0]  %s0, 256, %s23, [#allocation3], 128, 128, 8
    $region5: #{_lambda_.1} parent=1 // pred_fallthru
      _
    // Predicated region
    $region6: #{_lambda_.1} parent=1 // pred_check
      _
    $region7: #{_lambda_.1} parent=1 // pred_check_branch
      %30 = sbr.rel (0) target = $region9
    $region8: #{_lambda_.1} parent=1 // pred_region
      %s32 = ssub.s32 512, 512
      %33 = vsyncadd [#allocation5], %s32
      %s34 = sshll.u32 [#allocation4], 4
      %s35 = int_to_ptr.vmem [resolvable:$true] %s34
      %40 = dma.hbm_to_vmem [thread:$0]  %s1, 512, %s35, [#allocation5], 128, 128, 8
    $region9: #{_lambda_.1} parent=1 // pred_fallthru
      _
    // Predicated region
    $region10: #{_lambda_.1} parent=1 // pred_check
      _
    $region11: #{_lambda_.1} parent=1 // pred_check_branch
      %42 = sbr.rel (0) target = $region13
    $region12: #{_lambda_.1} parent=1 // pred_region
      _
    $region13: #{_lambda_.1} parent=1 // pred_fallthru
      _
    // Predicated region
    $region14: #{_lambda_.1} parent=1 // pred_check
      _
    $region15: #{_lambda_.1} parent=1 // pred_check_branch
      %44 = sbr.rel (0) target = $region17
    $region16: #{_lambda_.1} parent=1 // pred_region
      %s46 = ssub.s32 4096, 4096
      %47 = vsyncadd [#allocation5], %s46
      %s48 = sshll.u32 [#allocation6], 4
      %s49 = int_to_ptr.vmem [resolvable:$true] %s48
      %54 = dma.hbm_to_vmem [thread:$0]  %s3, 4096, %s49, [#allocation5], 128, 128, 8
    $region17: #{_lambda_.1} parent=1 // pred_fallthru
      _
    // Predicated region
    $region18: #{_lambda_.1} parent=1 // pred_check
      _
    $region19: #{_lambda_.1} parent=1 // pred_check_branch
      %56 = sbr.rel (0) target = $region21
    $region20: #{_lambda_.1} parent=1 // pred_region
      _
    $region21: #{_lambda_.1} parent=1 // pred_fallthru
      _
    // Predicated region
    $region22: #{_lambda_.1} parent=1 // pred_check
      _
    $region23: #{_lambda_.1} parent=1 // pred_check_branch
      %58 = sbr.rel (0) target = $region25
    $region24: #{_lambda_.1} parent=1 // pred_region
      %s60 = ssub.s32 2048, 2048
      %61 = vsyncadd [#allocation8], %s60
      %s62 = sshll.u32 [#allocation7], 4
      %s63 = int_to_ptr.vmem [resolvable:$true] %s62
      %68 = dma.hbm_to_vmem [thread:$0]  %s5, 2048, %s63, [#allocation8], 128, 128, 8
    $region25: #{_lambda_.1} parent=1 // pred_fallthru
      _
    // Predicated region
    $region26: #{_lambda_.1} parent=1 // pred_check
      _
    $region27: #{_lambda_.1} parent=1 // pred_check_branch
      %70 = sbr.rel (0) target = $region29
    $region28: #{_lambda_.1} parent=1 // pred_region
      _
    $region29: #{_lambda_.1} parent=1 // pred_fallthru
      _
    // Predicated region
    $region30: #{_lambda_.1} parent=1 // pred_check
      _
    $region31: #{_lambda_.1} parent=1 // pred_check_branch
      %72 = sbr.rel (0) target = $region33
    $region32: #{_lambda_.1} parent=1 // pred_region
      %73 = dma.done [#allocation3], 256
    $region33: #{_lambda_.1} parent=1 // pred_fallthru
      _
    // Predicated region
    $region34: #{_lambda_.1} parent=1 // pred_check
      _
    $region35: #{_lambda_.1} parent=1 // pred_check_branch
      %75 = sbr.rel (0) target = $region37
    $region36: #{_lambda_.1} parent=1 // pred_region
      %76 = dma.done [#allocation5], 512
    $region37: #{_lambda_.1} parent=1 // pred_fallthru
      _
    // Predicated region
    $region38: #{_lambda_.1} parent=1 // pred_check
      _
    $region39: #{_lambda_.1} parent=1 // pred_check_branch
      %78 = sbr.rel (0) target = $region41
    $region40: #{_lambda_.1} parent=1 // pred_region
      %79 = dma.done [#allocation5], 4096
    $region41: #{_lambda_.1} parent=1 // pred_fallthru
      _
    // Predicated region
    $region42: #{_lambda_.1} parent=1 // pred_check
      _
    $region43: #{_lambda_.1} parent=1 // pred_check_branch
      %81 = sbr.rel (0) target = $region45
    $region44: #{_lambda_.1} parent=1 // pred_region
      %82 = dma.done [#allocation8], 2048
    $region45: #{_lambda_.1} parent=1 // pred_fallthru
      _
    %v83 = vld [vmem:[#allocation2] sm:$0xff]
    %v84 = vld [vmem:[#allocation2 + $0x8] sm:$0xff]
    %v85 = vld [vmem:[#allocation4] sm:$0xff]
    %v86 = vld [vmem:[#allocation4 + $0x8] sm:$0xff]
    %v87 = vld [vmem:[#allocation4 + $0x10] sm:$0xff]
    %v88 = vld [vmem:[#allocation4 + $0x18] sm:$0xff]
    %v89 = vld [vmem:[%s2] sm:$0x1]
    %v91 = vlaneseq
    %v92 = vshrl.u32 %v91, 7
    %v93 = vsub.s32 0, %v92
    %v94 = vrot.slane %v89, %v93
    %vm96 = vcmask 261120
    %v98 = vsel %vm96, %v83, 0
    %v101 = vsel %vm96, %v84, 0
    %103 = vmatprep.subr.mxu0 0.0
    %104 = vmatpush1.msra.mxu0 %v85
    %105 = vmatprep.subr.mxu0 0.0
    %106 = vmatpush1.msra.mxu0 %v86
    %107 = vmatprep.subr.mxu0 0.0
    %108 = vmatpush1.msra.mxu0 %v87
    %109 = vmatprep.subr.mxu0 0.0
    %110 = vmatpush1.msra.mxu0 %v88
    %111 = vmatprep.subr.mxu0 0.0
    %112 = vmatpush1.msra.mxu0 0.0
    %113 = vmatprep.subr.mxu0 0.0
    %114 = vmatpush1.msra.mxu0 0.0
    %115 = vmatprep.subr.mxu0 0.0
    %116 = vmatpush1.msra.mxu0 0.0
    %117 = vmatprep.subr.mxu0 0.0
    %118 = vmatpush1.msra.mxu0 0.0
    %119 = vmatprep.subr.mxu0 0.0
    %120 = vmatpush1.msra.mxu0 0.0
    %121 = vmatprep.subr.mxu0 0.0
    %122 = vmatpush1.msra.mxu0 0.0
    %123 = vmatprep.subr.mxu0 0.0
    %124 = vmatpush1.msra.mxu0 0.0
    %125 = vmatprep.subr.mxu0 0.0
    %126 = vmatpush1.msra.mxu0 0.0
    %127 = vmatprep.subr.mxu0 0.0
    %128 = vmatpush1.msra.mxu0 0.0
    %129 = vmatprep.subr.mxu0 0.0
    %130 = vmatpush1.msra.mxu0 0.0
    %131 = vmatprep.subr.mxu0 0.0
    %132 = vmatpush1.msra.mxu0 0.0
    %133 = vmatprep.subr.mxu0 0.0
    %134 = vmatpush1.msra.mxu0 0.0
    %135 = vmatprep.subr.mxu0 0.0
    %136 = vmatpush1.msra.mxu0 0.0
    %137 = vmatprep.subr.mxu0 0.0
    %138 = vmatpush1.msra.mxu0 0.0
    %139 = vmatprep.subr.mxu0 0.0
    %140 = vmatpush1.msra.mxu0 0.0
    %141 = vmatprep.subr.mxu0 0.0
    %142 = vmatpush1.msra.mxu0 0.0
    %143 = vmatprep.subr.mxu0 0.0
    %144 = vmatpush1.msra.mxu0 0.0
    %145 = vmatprep.subr.mxu0 0.0
    %146 = vmatpush1.msra.mxu0 0.0
    %147 = vmatprep.subr.mxu0 0.0
    %148 = vmatpush1.msra.mxu0 0.0
    %149 = vmatprep.subr.mxu0 0.0
    %150 = vmatpush1.msra.mxu0 0.0
    %151 = vmatprep.subr.mxu0 0.0
    %152 = vmatpush1.msra.mxu0 0.0
    %153 = vmatprep.subr.mxu0 0.0
    %154 = vmatpush1.msra.mxu0 0.0
    %155 = vmatprep.subr.mxu0 0.0
    %156 = vmatpush1.msra.mxu0 0.0
    %157 = vmatprep.subr.mxu0 0.0
    %158 = vmatpush1.msra.mxu0 0.0
    %159 = vmatprep.subr.mxu0 0.0
    %160 = vmatpush1.msra.mxu0 0.0
    %161 = vmatprep.subr.mxu0 0.0
    %162 = vmatpush1.msra.mxu0 0.0
    %163 = vmatprep.subr.mxu0 0.0
    %164 = vmatpush1.msra.mxu0 0.0
    %165 = vmatprep.subr.mxu0 0.0
    %166 = vmatpush1.msra.mxu0 0.0
    %167 = vmatprep.mubr.f32.mxu0 0.0
    %168 = vmatmul.mubr.f32.gmra.mrb[0].mxu0 %v98
    %v169 = vpop.f32.mrb[0].mxu0
    %v170 = vadd.f32 %v94, %v169
    %v171 = vpop.f32.mrb[0].mxu0
    %172 = vmatprep.mubr.f32.mxu0 0.0
    %173 = vmatmul.mubr.f32.gmra.mrb[0].mxu0 %v101
    %v174 = vpop.f32.mrb[0].mxu0
    %v175 = vadd.f32 %v94, %v174
    %v176 = vpop.f32.mrb[0].mxu0
    %177 = vdwg.mxu0
    %v178 = vmul.f32 %v170, 0.01
    %v179 = vmul.f32 %v175, 0.01
    %v180 = vmax.f32 %v170, %v178
    %v181 = vmax.f32 %v175, %v179
    %v182 = vld [vmem:[#allocation6] sm:$0xff]
    %v183 = vld [vmem:[#allocation6 + $0x8] sm:$0xff]
    %v184 = vld [vmem:[#allocation6 + $0x10] sm:$0xff]
    %v185 = vld [vmem:[#allocation6 + $0x18] sm:$0xff]
    %v186 = vld [vmem:[#allocation6 + $0x20] sm:$0xff]
    %v187 = vld [vmem:[#allocation6 + $0x28] sm:$0xff]
    %v188 = vld [vmem:[#allocation6 + $0x30] sm:$0xff]
    %v189 = vld [vmem:[#allocation6 + $0x38] sm:$0xff]
    %v190 = vld [vmem:[#allocation6 + $0x40] sm:$0xff]
    %v191 = vld [vmem:[#allocation6 + $0x48] sm:$0xff]
    %v192 = vld [vmem:[#allocation6 + $0x50] sm:$0xff]
    %v193 = vld [vmem:[#allocation6 + $0x58] sm:$0xff]
    %v194 = vld [vmem:[#allocation6 + $0x60] sm:$0xff]
    %v195 = vld [vmem:[#allocation6 + $0x68] sm:$0xff]
    %v196 = vld [vmem:[#allocation6 + $0x70] sm:$0xff]
    %v197 = vld [vmem:[#allocation6 + $0x78] sm:$0xff]
    %v198 = vld [vmem:[%s4] sm:$0x1]
    %v200 = vlaneseq
    %v201 = vshrl.u32 %v200, 7
    %v202 = vsub.s32 0, %v201
    %v203 = vrot.slane %v198, %v202
    %205 = vmatprep.subr.mxu0 0.0
    %206 = vmatpush1.msra.mxu0 %v182
    %207 = vmatprep.subr.mxu0 0.0
    %208 = vmatpush1.msra.mxu0 %v183
    %209 = vmatprep.subr.mxu0 0.0
    %210 = vmatpush1.msra.mxu0 %v184
    %211 = vmatprep.subr.mxu0 0.0
    %212 = vmatpush1.msra.mxu0 %v185
    %213 = vmatprep.subr.mxu0 0.0
    %214 = vmatpush1.msra.mxu0 %v186
    %215 = vmatprep.subr.mxu0 0.0
    %216 = vmatpush1.msra.mxu0 %v187
    %217 = vmatprep.subr.mxu0 0.0
    %218 = vmatpush1.msra.mxu0 %v188
    %219 = vmatprep.subr.mxu0 0.0
    %220 = vmatpush1.msra.mxu0 %v189
    %221 = vmatprep.subr.mxu0 0.0
    %222 = vmatpush1.msra.mxu0 %v190
    %223 = vmatprep.subr.mxu0 0.0
    %224 = vmatpush1.msra.mxu0 %v191
    %225 = vmatprep.subr.mxu0 0.0
    %226 = vmatpush1.msra.mxu0 %v192
    %227 = vmatprep.subr.mxu0 0.0
    %228 = vmatpush1.msra.mxu0 %v193
    %229 = vmatprep.subr.mxu0 0.0
    %230 = vmatpush1.msra.mxu0 %v194
    %231 = vmatprep.subr.mxu0 0.0
    %232 = vmatpush1.msra.mxu0 %v195
    %233 = vmatprep.subr.mxu0 0.0
    %234 = vmatpush1.msra.mxu0 %v196
    %235 = vmatprep.subr.mxu0 0.0
    %236 = vmatpush1.msra.mxu0 %v197
    %237 = vmatprep.subr.mxu0 0.0
    %238 = vmatpush1.msra.mxu0 0.0
    %239 = vmatprep.subr.mxu0 0.0
    %240 = vmatpush1.msra.mxu0 0.0
    %241 = vmatprep.subr.mxu0 0.0
    %242 = vmatpush1.msra.mxu0 0.0
    %243 = vmatprep.subr.mxu0 0.0
    %244 = vmatpush1.msra.mxu0 0.0
    %245 = vmatprep.subr.mxu0 0.0
    %246 = vmatpush1.msra.mxu0 0.0
    %247 = vmatprep.subr.mxu0 0.0
    %248 = vmatpush1.msra.mxu0 0.0
    %249 = vmatprep.subr.mxu0 0.0
    %250 = vmatpush1.msra.mxu0 0.0
    %251 = vmatprep.subr.mxu0 0.0
    %252 = vmatpush1.msra.mxu0 0.0
    %253 = vmatprep.subr.mxu0 0.0
    %254 = vmatpush1.msra.mxu0 0.0
    %255 = vmatprep.subr.mxu0 0.0
    %256 = vmatpush1.msra.mxu0 0.0
    %257 = vmatprep.subr.mxu0 0.0
    %258 = vmatpush1.msra.mxu0 0.0
    %259 = vmatprep.subr.mxu0 0.0
    %260 = vmatpush1.msra.mxu0 0.0
    %261 = vmatprep.subr.mxu0 0.0
    %262 = vmatpush1.msra.mxu0 0.0
    %263 = vmatprep.subr.mxu0 0.0
    %264 = vmatpush1.msra.mxu0 0.0
    %265 = vmatprep.subr.mxu0 0.0
    %266 = vmatpush1.msra.mxu0 0.0
    %267 = vmatprep.subr.mxu0 0.0
    %268 = vmatpush1.msra.mxu0 0.0
    %269 = vmatprep.mubr.f32.mxu0 0.0
    %270 = vmatmul.mubr.f32.gmra.mrb[0].mxu0 %v180
    %v271 = vpop.f32.mrb[0].mxu0
    %v272 = vadd.f32 %v203, %v271
    %v273 = vpop.f32.mrb[0].mxu0
    %274 = vmatprep.mubr.f32.mxu0 0.0
    %275 = vmatmul.mubr.f32.gmra.mrb[0].mxu0 %v181
    %v276 = vpop.f32.mrb[0].mxu0
    %v277 = vadd.f32 %v203, %v276
    %v278 = vpop.f32.mrb[0].mxu0
    %279 = vdwg.mxu0
    %v280 = vmul.f32 %v272, 0.01
    %v281 = vmul.f32 %v277, 0.01
    %v282 = vmax.f32 %v272, %v280
    %v283 = vmax.f32 %v277, %v281
    %s284 = scalar_lea.vmem [#allocation6], 128
    %v285 = vld [vmem:[%s284] sm:$0xff]
    %v286 = vld [vmem:[%s284 + $0x8] sm:$0xff]
    %v287 = vld [vmem:[%s284 + $0x10] sm:$0xff]
    %v288 = vld [vmem:[%s284 + $0x18] sm:$0xff]
    %v289 = vld [vmem:[%s284 + $0x20] sm:$0xff]
    %v290 = vld [vmem:[%s284 + $0x28] sm:$0xff]
    %v291 = vld [vmem:[%s284 + $0x30] sm:$0xff]
    %v292 = vld [vmem:[%s284 + $0x38] sm:$0xff]
    %v293 = vld [vmem:[%s284 + $0x40] sm:$0xff]
    %v294 = vld [vmem:[%s284 + $0x48] sm:$0xff]
    %v295 = vld [vmem:[%s284 + $0x50] sm:$0xff]
    %v296 = vld [vmem:[%s284 + $0x58] sm:$0xff]
    %v297 = vld [vmem:[%s284 + $0x60] sm:$0xff]
    %v298 = vld [vmem:[%s284 + $0x68] sm:$0xff]
    %v299 = vld [vmem:[%s284 + $0x70] sm:$0xff]
    %v300 = vld [vmem:[%s284 + $0x78] sm:$0xff]
    %s301 = scalar_lea.vmem %s4, 1
    %v302 = vld [vmem:[%s301] sm:$0x1]
    %v304 = vlaneseq
    %v305 = vshrl.u32 %v304, 7
    %v306 = vsub.s32 0, %v305
    %v307 = vrot.slane %v302, %v306
    %309 = vmatprep.subr.mxu0 0.0
    %310 = vmatpush1.msra.mxu0 %v285
    %311 = vmatprep.subr.mxu0 0.0
    %312 = vmatpush1.msra.mxu0 %v286
    %313 = vmatprep.subr.mxu0 0.0
    %314 = vmatpush1.msra.mxu0 %v287
    %315 = vmatprep.subr.mxu0 0.0
    %316 = vmatpush1.msra.mxu0 %v288
    %317 = vmatprep.subr.mxu0 0.0
    %318 = vmatpush1.msra.mxu0 %v289
    %319 = vmatprep.subr.mxu0 0.0
    %320 = vmatpush1.msra.mxu0 %v290
    %321 = vmatprep.subr.mxu0 0.0
    %322 = vmatpush1.msra.mxu0 %v291
    %323 = vmatprep.subr.mxu0 0.0
    %324 = vmatpush1.msra.mxu0 %v292
    %325 = vmatprep.subr.mxu0 0.0
    %326 = vmatpush1.msra.mxu0 %v293
    %327 = vmatprep.subr.mxu0 0.0
    %328 = vmatpush1.msra.mxu0 %v294
    %329 = vmatprep.subr.mxu0 0.0
    %330 = vmatpush1.msra.mxu0 %v295
    %331 = vmatprep.subr.mxu0 0.0
    %332 = vmatpush1.msra.mxu0 %v296
    %333 = vmatprep.subr.mxu0 0.0
    %334 = vmatpush1.msra.mxu0 %v297
    %335 = vmatprep.subr.mxu0 0.0
    %336 = vmatpush1.msra.mxu0 %v298
    %337 = vmatprep.subr.mxu0 0.0
    %338 = vmatpush1.msra.mxu0 %v299
    %339 = vmatprep.subr.mxu0 0.0
    %340 = vmatpush1.msra.mxu0 %v300
    %341 = vmatprep.subr.mxu0 0.0
    %342 = vmatpush1.msra.mxu0 0.0
    %343 = vmatprep.subr.mxu0 0.0
    %344 = vmatpush1.msra.mxu0 0.0
    %345 = vmatprep.subr.mxu0 0.0
    %346 = vmatpush1.msra.mxu0 0.0
    %347 = vmatprep.subr.mxu0 0.0
    %348 = vmatpush1.msra.mxu0 0.0
    %349 = vmatprep.subr.mxu0 0.0
    %350 = vmatpush1.msra.mxu0 0.0
    %351 = vmatprep.subr.mxu0 0.0
    %352 = vmatpush1.msra.mxu0 0.0
    %353 = vmatprep.subr.mxu0 0.0
    %354 = vmatpush1.msra.mxu0 0.0
    %355 = vmatprep.subr.mxu0 0.0
    %356 = vmatpush1.msra.mxu0 0.0
    %357 = vmatprep.subr.mxu0 0.0
    %358 = vmatpush1.msra.mxu0 0.0
    %359 = vmatprep.subr.mxu0 0.0
    %360 = vmatpush1.msra.mxu0 0.0
    %361 = vmatprep.subr.mxu0 0.0
    %362 = vmatpush1.msra.mxu0 0.0
    %363 = vmatprep.subr.mxu0 0.0
    %364 = vmatpush1.msra.mxu0 0.0
    %365 = vmatprep.subr.mxu0 0.0
    %366 = vmatpush1.msra.mxu0 0.0
    %367 = vmatprep.subr.mxu0 0.0
    %368 = vmatpush1.msra.mxu0 0.0
    %369 = vmatprep.subr.mxu0 0.0
    %370 = vmatpush1.msra.mxu0 0.0
    %371 = vmatprep.subr.mxu0 0.0
    %372 = vmatpush1.msra.mxu0 0.0
    %373 = vmatprep.mubr.f32.mxu0 0.0
    %374 = vmatmul.mubr.f32.gmra.mrb[0].mxu0 %v282
    %v375 = vpop.f32.mrb[0].mxu0
    %v376 = vadd.f32 %v307, %v375
    %v377 = vpop.f32.mrb[0].mxu0
    %378 = vmatprep.mubr.f32.mxu0 0.0
    %379 = vmatmul.mubr.f32.gmra.mrb[0].mxu0 %v283
    %v380 = vpop.f32.mrb[0].mxu0
    %v381 = vadd.f32 %v307, %v380
    %v382 = vpop.f32.mrb[0].mxu0
    %383 = vdwg.mxu0
    %v384 = vmul.f32 %v376, 0.01
    %v385 = vmul.f32 %v381, 0.01
    %v386 = vmax.f32 %v376, %v384
    %v387 = vmax.f32 %v381, %v385
    %388 = vst [vmem:[%s8] sm:$0xff] %v386
    %389 = vst [vmem:[%s8 + $0x8] sm:$0xff] %v387
    %v390 = vld [vmem:[#allocation7] sm:$0xff]
    %v391 = vld [vmem:[#allocation7 + $0x8] sm:$0xff]
    %v392 = vld [vmem:[#allocation7 + $0x10] sm:$0xff]
    %v393 = vld [vmem:[#allocation7 + $0x18] sm:$0xff]
    %v394 = vld [vmem:[#allocation7 + $0x20] sm:$0xff]
    %v395 = vld [vmem:[#allocation7 + $0x28] sm:$0xff]
    %v396 = vld [vmem:[#allocation7 + $0x30] sm:$0xff]
    %v397 = vld [vmem:[#allocation7 + $0x38] sm:$0xff]
    %v398 = vld [vmem:[#allocation7 + $0x40] sm:$0xff]
    %v399 = vld [vmem:[#allocation7 + $0x48] sm:$0xff]
    %v400 = vld [vmem:[#allocation7 + $0x50] sm:$0xff]
    %v401 = vld [vmem:[#allocation7 + $0x58] sm:$0xff]
    %v402 = vld [vmem:[#allocation7 + $0x60] sm:$0xff]
    %v403 = vld [vmem:[#allocation7 + $0x68] sm:$0xff]
    %v404 = vld [vmem:[#allocation7 + $0x70] sm:$0xff]
    %v405 = vld [vmem:[#allocation7 + $0x78] sm:$0xff]
    %v406 = vld [vmem:[%s6] sm:$0x1]
    %v408 = vlaneseq
    %v409 = vshrl.u32 %v408, 7
    %v410 = vsub.s32 0, %v409
    %v411 = vrot.slane %v406, %v410
    %413 = vmatprep.subr.mxu0 0.0
    %414 = vmatpush1.msra.mxu0 %v390
    %415 = vmatprep.subr.mxu0 0.0
    %416 = vmatpush1.msra.mxu0 %v391
    %417 = vmatprep.subr.mxu0 0.0
    %418 = vmatpush1.msra.mxu0 %v392
    %419 = vmatprep.subr.mxu0 0.0
    %420 = vmatpush1.msra.mxu0 %v393
    %421 = vmatprep.subr.mxu0 0.0
    %422 = vmatpush1.msra.mxu0 %v394
    %423 = vmatprep.subr.mxu0 0.0
    %424 = vmatpush1.msra.mxu0 %v395
    %425 = vmatprep.subr.mxu0 0.0
    %426 = vmatpush1.msra.mxu0 %v396
    %427 = vmatprep.subr.mxu0 0.0
    %428 = vmatpush1.msra.mxu0 %v397
    %429 = vmatprep.subr.mxu0 0.0
    %430 = vmatpush1.msra.mxu0 %v398
    %431 = vmatprep.subr.mxu0 0.0
    %432 = vmatpush1.msra.mxu0 %v399
    %433 = vmatprep.subr.mxu0 0.0
    %434 = vmatpush1.msra.mxu0 %v400
    %435 = vmatprep.subr.mxu0 0.0
    %436 = vmatpush1.msra.mxu0 %v401
    %437 = vmatprep.subr.mxu0 0.0
    %438 = vmatpush1.msra.mxu0 %v402
    %439 = vmatprep.subr.mxu0 0.0
    %440 = vmatpush1.msra.mxu0 %v403
    %441 = vmatprep.subr.mxu0 0.0
    %442 = vmatpush1.msra.mxu0 %v404
    %443 = vmatprep.subr.mxu0 0.0
    %444 = vmatpush1.msra.mxu0 %v405
    %445 = vmatprep.subr.mxu0 0.0
    %446 = vmatpush1.msra.mxu0 0.0
    %447 = vmatprep.subr.mxu0 0.0
    %448 = vmatpush1.msra.mxu0 0.0
    %449 = vmatprep.subr.mxu0 0.0
    %450 = vmatpush1.msra.mxu0 0.0
    %451 = vmatprep.subr.mxu0 0.0
    %452 = vmatpush1.msra.mxu0 0.0
    %453 = vmatprep.subr.mxu0 0.0
    %454 = vmatpush1.msra.mxu0 0.0
    %455 = vmatprep.subr.mxu0 0.0
    %456 = vmatpush1.msra.mxu0 0.0
    %457 = vmatprep.subr.mxu0 0.0
    %458 = vmatpush1.msra.mxu0 0.0
    %459 = vmatprep.subr.mxu0 0.0
    %460 = vmatpush1.msra.mxu0 0.0
    %461 = vmatprep.subr.mxu0 0.0
    %462 = vmatpush1.msra.mxu0 0.0
    %463 = vmatprep.subr.mxu0 0.0
    %464 = vmatpush1.msra.mxu0 0.0
    %465 = vmatprep.subr.mxu0 0.0
    %466 = vmatpush1.msra.mxu0 0.0
    %467 = vmatprep.subr.mxu0 0.0
    %468 = vmatpush1.msra.mxu0 0.0
    %469 = vmatprep.subr.mxu0 0.0
    %470 = vmatpush1.msra.mxu0 0.0
    %471 = vmatprep.subr.mxu0 0.0
    %472 = vmatpush1.msra.mxu0 0.0
    %473 = vmatprep.subr.mxu0 0.0
    %474 = vmatpush1.msra.mxu0 0.0
    %475 = vmatprep.subr.mxu0 0.0
    %476 = vmatpush1.msra.mxu0 0.0
    %477 = vmatprep.mubr.f32.mxu0 0.0
    %478 = vmatmul.mubr.f32.gmra.mrb[0].mxu0 %v386
    %v479 = vpop.f32.mrb[0].mxu0
    %v480 = vadd.f32 %v411, %v479
    %v481 = vpop.f32.mrb[0].mxu0
    %482 = vmatprep.mubr.f32.mxu0 0.0
    %483 = vmatmul.mubr.f32.gmra.mrb[0].mxu0 %v387
    %v484 = vpop.f32.mrb[0].mxu0
    %v485 = vadd.f32 %v411, %v484
    %v486 = vpop.f32.mrb[0].mxu0
    %487 = vdwg.mxu0
    %488 = vst [vmem:[%s7] sm:$0xff] %v480
    %489 = vst [vmem:[%s7 + $0x8] sm:$0xff] %v485
    // Predicated region
    $region46: #{_lambda_.1} parent=1 // pred_check
      _
    $region47: #{_lambda_.1} parent=1 // pred_check_branch
      %491 = sbr.rel (0) target = $region49
    $region48: #{_lambda_.1} parent=1 // pred_region
      _
    $region49: #{_lambda_.1} parent=1 // pred_fallthru
      _
    // Predicated region
    $region50: #{_lambda_.1} parent=1 // pred_check
      _
    $region51: #{_lambda_.1} parent=1 // pred_check_branch
      %493 = sbr.rel (0) target = $region53
    $region52: #{_lambda_.1} parent=1 // pred_region
      _
    $region53: #{_lambda_.1} parent=1 // pred_fallthru
      _
    // Predicated region
    $region54: #{_lambda_.1} parent=1 // pred_check
      _
    $region55: #{_lambda_.1} parent=1 // pred_check_branch
      %495 = sbr.rel (0) target = $region57
    $region56: #{_lambda_.1} parent=1 // pred_region
      _
    $region57: #{_lambda_.1} parent=1 // pred_fallthru
      _
    // Predicated region
    $region58: #{_lambda_.1} parent=1 // pred_check
      _
    $region59: #{_lambda_.1} parent=1 // pred_check_branch
      %497 = sbr.rel (0) target = $region61
    $region60: #{_lambda_.1} parent=1 // pred_region
      _
    $region61: #{_lambda_.1} parent=1 // pred_fallthru
      _
    %498 = vsyncpa [#allocation3], 1
    %499 = vsyncpa [#allocation5], 1
    %500 = vsyncpa [#allocation8], 1

</llo_original>
